<compile_context>
chip_gen: v7x
topology: tpu7x:2x2x1
jax: 0.10.0
libtpu: 0.0.40
codegen_flags: <defaults>
</compile_context>

<pallas_src>
import jax
import jax.numpy as jnp
from jax.experimental import pallas as pl
from jax.experimental.pallas import tpu as pltpu


def _round_up(x, m):
    return ((x + m - 1) // m) * m


def _cdiv(a, b):
    return (a + b - 1) // b


def _tpu_vmem_capacity_bytes():
    try:
        return int(pltpu.get_tpu_info().vmem_capacity_bytes)
    except Exception:
        return 64 * 1024 * 1024  # conservative fallback (v7x-sized)


def _num_tensorcores():
    # v7x has 2 TensorCores per chip that a "parallel" grid axis can shard across.
    try:
        kind = jax.devices()[0].device_kind.lower()
    except Exception:
        return 1
    return 2 if "v7" in kind else 1


def mlp_kernel(x_ref, w1_ref, b1_ref, w2_ref, b2_ref, o_ref):
    # Hidden layer: h = relu(x @ W1 + b1); MXU matmul with f32 accumulation.
    h = jnp.dot(x_ref[...], w1_ref[...], preferred_element_type=jnp.float32)
    h = jnp.maximum(h + b1_ref[...], 0.0)          # (tb,H) + (1,H) broadcast, ReLU on VPU
    # Output layer: y = h @ W2 + b2 (cast live intermediate to the weight dtype for the MXU).
    y = jnp.dot(h.astype(w2_ref.dtype), w2_ref[...], preferred_element_type=jnp.float32)
    o_ref[...] = (y + b2_ref[...]).astype(o_ref.dtype)


def prepare_params(w1, b1, w2, b2, *, use_bf16=False):
    """One-time parameter prep (hoisted out of the per-call path).

    w1: (F, H), b1: (H,), w2: (H, O), b2: (O,)  -- (in, out) layout, i.e. the
    transpose of PyTorch nn.Linear's (out, in) weight.
    use_bf16=True is an explicit inference-precision choice (bf16 MXU inputs,
    f32 accumulation); default keeps f32 to match PyTorch semantics.
    """
    wdt = jnp.bfloat16 if use_bf16 else jnp.float32
    return (
        w1.astype(wdt),
        b1.reshape(1, -1).astype(jnp.float32),
        w2.astype(wdt),
        b2.reshape(1, -1).astype(jnp.float32),
    )


def net_forward(x, params, *, block_batch=None):
    """x: (B, F); params from prepare_params(); returns (B, O) float32."""
    w1, b1, w2, b2 = params
    B, F = x.shape
    H = w1.shape[1]
    O = w2.shape[1]
    in_dtype = w1.dtype
    itemsize_in = jnp.dtype(in_dtype).itemsize
    x = x.astype(in_dtype)

    # ---- batch-tile selection (generation aware) ----------------------------
    weight_bytes = (F * H + H * O) * itemsize_in + (H + O) * 4
    vmem_cap = _tpu_vmem_capacity_bytes()
    budget = int(vmem_cap * 0.6)  # headroom for compiler scratch / pipeline bufs

    def per_step_bytes(t, nbuf):
        # buffered x tile + buffered out tile + live f32 hidden (+ dtype copy)
        return nbuf * t * F * itemsize_in + nbuf * t * O * 4 + t * H * (4 + itemsize_in)

    num_cores = _num_tensorcores()
    if block_batch is not None:
        steps = max(1, _cdiv(B, max(8, block_batch)))
    else:
        # v7x: >=2 steps so both TensorCores get a share of the batch.
        # v5e/v6e: one step -- weights are resident, extra steps are pure overhead.
        steps = num_cores if B >= 16 * num_cores else 1
    # Only grow the step count if a tile would blow the VMEM budget.
    while (weight_bytes + per_step_bytes(_round_up(_cdiv(B, steps), 8),
                                         2 if steps > 1 else 1) > budget
           and steps < B):
        steps *= 2

    if steps <= 1:
        tb, B_p, grid = B, B, (1,)          # block == full array: always legal
    else:
        tb = _round_up(_cdiv(B, steps), 8)  # balanced tiles -> minimal batch padding
        B_p = tb * steps
        grid = (steps,)

    if B_p != B:
        x = jnp.pad(x, ((0, B_p - B), (0, 0)))

    resident = pl.Buffered(1)  # grid-invariant operands: single VMEM copy
    if grid[0] == 1:
        x_spec = pl.BlockSpec((tb, F), lambda i: (i, 0), pipeline_mode=pl.Buffered(1))
    else:
        x_spec = pl.BlockSpec((tb, F), lambda i: (i, 0))

    needed = weight_bytes + per_step_bytes(tb, 2 if grid[0] > 1 else 1)
    vmem_limit = int(min(budget, max(16 * 1024 * 1024, 2 * needed)))

    # Advisory cost for XLA's scheduler -- real (unpadded) dims.
    cost = pl.CostEstimate(
        flops=2 * B * (F * H + H * O),
        transcendentals=0,
        bytes_accessed=B * F * itemsize_in + weight_bytes + B * O * 4,
    )

    out = pl.pallas_call(
        mlp_kernel,
        out_shape=jax.ShapeDtypeStruct((B_p, O), jnp.float32),
        grid_spec=pltpu.PrefetchScalarGridSpec(
            num_scalar_prefetch=0,
            grid=grid,
            in_specs=[
                x_spec,
                pl.BlockSpec((F, H), lambda i: (0, 0), pipeline_mode=resident),
                pl.BlockSpec((1, H), lambda i: (0, 0), pipeline_mode=resident),
                pl.BlockSpec((H, O), lambda i: (0, 0), pipeline_mode=resident),
                pl.BlockSpec((1, O), lambda i: (0, 0), pipeline_mode=resident),
            ],
            out_specs=pl.BlockSpec((tb, O), lambda i: (i, 0)),
        ),
        compiler_params=pltpu.CompilerParams(
            dimension_semantics=("parallel",),
            vmem_limit_bytes=vmem_limit,
        ),
        cost_estimate=cost,
    )(x, w1, b1, w2, b2)

    return out if B_p == B else out[:B]


def reference_forward(x, w1, b1, w2, b2):
    h = jnp.maximum(x @ w1 + b1, 0.0)
    return h @ w2 + b2


if __name__ == "__main__":
    # Shapes consistent with Net(n_feature, n_hidden, n_output).
    batch, n_feature, n_hidden, n_output = 256, 16, 32, 4

    key = jax.random.PRNGKey(0)
    kx, kw1, kb1, kw2, kb2 = jax.random.split(key, 5)

    x = jax.random.normal(kx, (batch, n_feature), dtype=jnp.float32)
    # Deterministic synthetic parameters (transpose of PyTorch's (out,in) layout).
    w1 = jax.random.normal(kw1, (n_feature, n_hidden), dtype=jnp.float32) * 0.1
    b1 = jax.random.normal(kb1, (n_hidden,), dtype=jnp.float32) * 0.1
    w2 = jax.random.normal(kw2, (n_hidden, n_output), dtype=jnp.float32) * 0.1
    b2 = jax.random.normal(kb2, (n_output,), dtype=jnp.float32) * 0.1

    ref = reference_forward(x, w1, b1, w2, b2)

    # Default f32 path (matches PyTorch's f32 Linear): auto tiling picks grid=(1,)
    # on v5e/v6e and 2 balanced steps on v7x.
    params_f32 = prepare_params(w1, b1, w2, b2, use_bf16=False)
    out = jax.block_until_ready(net_forward(x, params_f32))
    assert out.shape == (batch, n_output)
    assert jnp.allclose(out, ref, atol=1e-5, rtol=1e-5)

    # Ragged batch + explicit block_batch: exercises balanced multi-step tiling,
    # batch padding, and the final un-pad slice.
    out_r = jax.block_until_ready(net_forward(x[:100], params_f32, block_batch=48))
    ref_r = reference_forward(x[:100], w1, b1, w2, b2)
    assert out_r.shape == (100, n_output)
    assert jnp.allclose(out_r, ref_r, atol=1e-5, rtol=1e-5)

    # Explicit bf16 MXU fast path (documented precision trade-off).
    params_bf16 = prepare_params(w1, b1, w2, b2, use_bf16=True)
    out_bf = jax.block_until_ready(net_forward(x, params_bf16))
    assert out_bf.shape == (batch, n_output)
    assert jnp.allclose(out_bf, ref, atol=3e-2, rtol=3e-2)

    print("KERNEL_OK")
</pallas_src>

<mosaic_0001>
module attributes {stable_mosaic.version = 11 : i64} {
  func.func @mlp_kernel(%arg0: i32, %arg1: memref<256x16xf32, #tpu.memory_space<vmem>>, %arg2: memref<16x32xf32, #tpu.memory_space<vmem>>, %arg3: memref<1x32xf32, #tpu.memory_space<vmem>>, %arg4: memref<32x4xf32, #tpu.memory_space<vmem>>, %arg5: memref<1x4xf32, #tpu.memory_space<vmem>>, %arg6: memref<256x4xf32, #tpu.memory_space<vmem>>) attributes {dimension_semantics = [#tpu.dimension_semantics<parallel>], iteration_bounds = array<i64: 1>, scalar_prefetch = 0 : i64, scratch_operands = 0 : i64, tpu.core_type = #tpu.core_type<tc>, window_params = [{pipeline_mode = #tpu.pipeline_mode<synchronous>, transform_indices = @transform_0, window_bounds = array<i64: 256, 16>}, {pipeline_mode = #tpu.pipeline_mode<synchronous>, transform_indices = @transform_1, window_bounds = array<i64: 16, 32>}, {pipeline_mode = #tpu.pipeline_mode<synchronous>, transform_indices = @transform_2, window_bounds = array<i64: 1, 32>}, {pipeline_mode = #tpu.pipeline_mode<synchronous>, transform_indices = @transform_3, window_bounds = array<i64: 32, 4>}, {pipeline_mode = #tpu.pipeline_mode<synchronous>, transform_indices = @transform_4, window_bounds = array<i64: 1, 4>}, {transform_indices = @transform_5, window_bounds = array<i64: 256, 4>}]} {
    %c0 = arith.constant 0 : index
    %c0_0 = arith.constant 0 : index
    %0 = vector.load %arg1[%c0, %c0_0] : memref<256x16xf32, #tpu.memory_space<vmem>>, vector<256x16xf32>
    %c0_1 = arith.constant 0 : index
    %c0_2 = arith.constant 0 : index
    %1 = vector.load %arg2[%c0_1, %c0_2] : memref<16x32xf32, #tpu.memory_space<vmem>>, vector<16x32xf32>
    %cst = arith.constant dense<0.000000e+00> : vector<256x32xf32>
    %2 = tpu.matmul %0, %1, %cst {dimension_numbers = #tpu.dot_dimension_numbers<[1], [0], [0], [1], [0, 0, 1, 1], [], []>} : vector<256x16xf32>, vector<16x32xf32>, vector<256x32xf32> -> vector<256x32xf32>
    %c0_3 = arith.constant 0 : index
    %c0_4 = arith.constant 0 : index
    %3 = vector.load %arg3[%c0_3, %c0_4] : memref<1x32xf32, #tpu.memory_space<vmem>>, vector<1x32xf32>
    %4 = vector.broadcast %3 : vector<1x32xf32> to vector<256x32xf32>
    %5 = arith.addf %2, %4 : vector<256x32xf32>
    %cst_5 = arith.constant 0.000000e+00 : f32
    %6 = vector.broadcast %cst_5 : f32 to vector<256x32xf32>
    %7 = arith.maximumf %5, %6 : vector<256x32xf32>
    %c0_6 = arith.constant 0 : index
    %c0_7 = arith.constant 0 : index
    %8 = vector.load %arg4[%c0_6, %c0_7] : memref<32x4xf32, #tpu.memory_space<vmem>>, vector<32x4xf32>
    %cst_8 = arith.constant dense<0.000000e+00> : vector<256x4xf32>
    %9 = tpu.matmul %7, %8, %cst_8 {dimension_numbers = #tpu.dot_dimension_numbers<[1], [0], [0], [1], [0, 0, 1, 1], [], []>} : vector<256x32xf32>, vector<32x4xf32>, vector<256x4xf32> -> vector<256x4xf32>
    %c0_9 = arith.constant 0 : index
    %c0_10 = arith.constant 0 : index
    %10 = vector.load %arg5[%c0_9, %c0_10] : memref<1x4xf32, #tpu.memory_space<vmem>>, vector<1x4xf32>
    %11 = vector.broadcast %10 : vector<1x4xf32> to vector<256x4xf32>
    %12 = arith.addf %9, %11 : vector<256x4xf32>
    %c0_11 = arith.constant 0 : index
    %c0_12 = arith.constant 0 : index
    %13 = vector.load %arg6[%c0_11, %c0_12] : memref<256x4xf32, #tpu.memory_space<vmem>>, vector<256x4xf32>
    tpu.vector_store %arg6[%c0_11, %c0_12], %12 {strides = array<i32>} : memref<256x4xf32, #tpu.memory_space<vmem>>, vector<256x4xf32>,
    return
  }
  func.func @transform_0(%arg0: i32) -> (i32, i32) {
    %c0_i32 = arith.constant 0 : i32
    %c0_i32_0 = arith.constant 0 : i32
    return %arg0, %c0_i32 : i32, i32
  }
  func.func @transform_1(%arg0: i32) -> (i32, i32) {
    %c0_i32 = arith.constant 0 : i32
    %c0_i32_0 = arith.constant 0 : i32
    %c0_i32_1 = arith.constant 0 : i32
    return %c0_i32, %c0_i32_0 : i32, i32
  }
  func.func @transform_2(%arg0: i32) -> (i32, i32) {
    %c0_i32 = arith.constant 0 : i32
    %c0_i32_0 = arith.constant 0 : i32
    %c0_i32_1 = arith.constant 0 : i32
    return %c0_i32, %c0_i32_0 : i32, i32
  }
  func.func @transform_3(%arg0: i32) -> (i32, i32) {
    %c0_i32 = arith.constant 0 : i32
    %c0_i32_0 = arith.constant 0 : i32
    %c0_i32_1 = arith.constant 0 : i32
    return %c0_i32, %c0_i32_0 : i32, i32
  }
  func.func @transform_4(%arg0: i32) -> (i32, i32) {
    %c0_i32 = arith.constant 0 : i32
    %c0_i32_0 = arith.constant 0 : i32
    %c0_i32_1 = arith.constant 0 : i32
    return %c0_i32, %c0_i32_0 : i32, i32
  }
  func.func @transform_5(%arg0: i32) -> (i32, i32) {
    %c0_i32 = arith.constant 0 : i32
    %c0_i32_0 = arith.constant 0 : i32
    return %arg0, %c0_i32 : i32, i32
  }
}

</mosaic_0001>

<llo_original>
// kernel: tpu_custom_call.1
$region0: #{tpu_custom_call.1}
  #allocation0 [shape = 'u32[]', space=smem, size = 0x4, offset = 0x4, fixed_abs, tag = 'smem constant byte address 0x4 - core index']
  #allocation1 [shape = 'u32[144,128]{1,0:T(1,128)}', space=vmem, size = 0x12000, scoped, tag = 'internal scratch']
  %s0 = inlined_call_operand.vmem [shape: f32[256,16], index: 0, kind: input, shape index: {}]
  %s1 = inlined_call_operand.vmem [shape: f32[16,32], index: 1, kind: input, shape index: {}]
  %s2 = inlined_call_operand.vmem [shape: f32[1,32], index: 2, kind: input, shape index: {}]
  %s3 = inlined_call_operand.vmem [shape: f32[32,4], index: 3, kind: input, shape index: {}]
  %s4 = inlined_call_operand.vmem [shape: f32[1,4], index: 4, kind: input, shape index: {}]
  %s5 = inlined_call_operand.vmem [shape: f32[256,4], index: 5, kind: output, shape index: {}]
  %s6 = sld [smem:[#allocation0]]
  $region30: #{tpu_custom_call.1} parent=0
    _
  %s8 = ssub.s32 1, %s6
  %s9 = scalar_select 0, %s8, %s6
  // Predicated region
  $region2: #{tpu_custom_call.1} parent=0 // pred_check
    _
  $region3: #{tpu_custom_call.1} parent=0 // pred_check_branch
    %11 = sbr.rel (0) target = $region5
  $region4: #{tpu_custom_call.1} parent=0 // pred_region
    _
  $region5: #{tpu_custom_call.1} parent=0 // pred_fallthru
    _
  // Predicated region
  $region6: #{tpu_custom_call.1} parent=0 // pred_check
    _
  $region7: #{tpu_custom_call.1} parent=0 // pred_check_branch
    %13 = sbr.rel (0) target = $region9
  $region8: #{tpu_custom_call.1} parent=0 // pred_region
    _
  $region9: #{tpu_custom_call.1} parent=0 // pred_fallthru
    _
  // Predicated region
  $region10: #{tpu_custom_call.1} parent=0 // pred_check
    _
  $region11: #{tpu_custom_call.1} parent=0 // pred_check_branch
    %15 = sbr.rel (0) target = $region13
  $region12: #{tpu_custom_call.1} parent=0 // pred_region
    _
  $region13: #{tpu_custom_call.1} parent=0 // pred_fallthru
    _
  // Predicated region
  $region14: #{tpu_custom_call.1} parent=0 // pred_check
    _
  $region15: #{tpu_custom_call.1} parent=0 // pred_check_branch
    %17 = sbr.rel (0) target = $region17
  $region16: #{tpu_custom_call.1} parent=0 // pred_region
    _
  $region17: #{tpu_custom_call.1} parent=0 // pred_fallthru
    _
  // Predicated region
  $region18: #{tpu_custom_call.1} parent=0 // pred_check
    _
  $region19: #{tpu_custom_call.1} parent=0 // pred_check_branch
    %19 = sbr.rel (0) target = $region21
  $region20: #{tpu_custom_call.1} parent=0 // pred_region
    _
  $region21: #{tpu_custom_call.1} parent=0 // pred_fallthru
    _
  %v20 = vld [vmem:[%s0] sm:$0xff]
  %v21 = vld [vmem:[%s0 + $0x8] sm:$0xff]
  %v22 = vld [vmem:[%s0 + $0x10] sm:$0xff]
  %v23 = vld [vmem:[%s0 + $0x18] sm:$0xff]
  %v24 = vld [vmem:[%s0 + $0x20] sm:$0xff]
  %v25 = vld [vmem:[%s0 + $0x28] sm:$0xff]
  %v26 = vld [vmem:[%s0 + $0x30] sm:$0xff]
  %v27 = vld [vmem:[%s0 + $0x38] sm:$0xff]
  %v28 = vld [vmem:[%s0 + $0x40] sm:$0xff]
  %v29 = vld [vmem:[%s0 + $0x48] sm:$0xff]
  %v30 = vld [vmem:[%s0 + $0x50] sm:$0xff]
  %v31 = vld [vmem:[%s0 + $0x58] sm:$0xff]
  %v32 = vld [vmem:[%s0 + $0x60] sm:$0xff]
  %v33 = vld [vmem:[%s0 + $0x68] sm:$0xff]
  %v34 = vld [vmem:[%s0 + $0x70] sm:$0xff]
  %v35 = vld [vmem:[%s0 + $0x78] sm:$0xff]
  %v36 = vld [vmem:[%s0 + $0x80] sm:$0xff]
  %v37 = vld [vmem:[%s0 + $0x88] sm:$0xff]
  %v38 = vld [vmem:[%s0 + $0x90] sm:$0xff]
  %v39 = vld [vmem:[%s0 + $0x98] sm:$0xff]
  %v40 = vld [vmem:[%s0 + $0xa0] sm:$0xff]
  %v41 = vld [vmem:[%s0 + $0xa8] sm:$0xff]
  %v42 = vld [vmem:[%s0 + $0xb0] sm:$0xff]
  %v43 = vld [vmem:[%s0 + $0xb8] sm:$0xff]
  %v44 = vld [vmem:[%s0 + $0xc0] sm:$0xff]
  %v45 = vld [vmem:[%s0 + $0xc8] sm:$0xff]
  %v46 = vld [vmem:[%s0 + $0xd0] sm:$0xff]
  %v47 = vld [vmem:[%s0 + $0xd8] sm:$0xff]
  %v48 = vld [vmem:[%s0 + $0xe0] sm:$0xff]
  %v49 = vld [vmem:[%s0 + $0xe8] sm:$0xff]
  %v50 = vld [vmem:[%s0 + $0xf0] sm:$0xff]
  %v51 = vld [vmem:[%s0 + $0xf8] sm:$0xff]
  %v52 = vld [vmem:[%s1] sm:$0xff]
  %v53 = vld [vmem:[%s1 + $0x8] sm:$0xff]
  %v54 = vld [vmem:[%s2] sm:$0x1]
  %v56 = vlaneseq
  %v57 = vshrl.u32 %v56, 7
  %v58 = vsub.s32 0, %v57
  %v59 = vrot.slane %v54, %v58
  %vm61 = vcmask 130048
  %v63 = vsel %vm61, %v20, 0
  %v66 = vsel %vm61, %v21, 0
  %v69 = vsel %vm61, %v22, 0
  %v72 = vsel %vm61, %v23, 0
  %v75 = vsel %vm61, %v24, 0
  %v78 = vsel %vm61, %v25, 0
  %v81 = vsel %vm61, %v26, 0
  %v84 = vsel %vm61, %v27, 0
  %v87 = vsel %vm61, %v28, 0
  %v90 = vsel %vm61, %v29, 0
  %v93 = vsel %vm61, %v30, 0
  %v96 = vsel %vm61, %v31, 0
  %v99 = vsel %vm61, %v32, 0
  %v102 = vsel %vm61, %v33, 0
  %v105 = vsel %vm61, %v34, 0
  %v108 = vsel %vm61, %v35, 0
  %v111 = vsel %vm61, %v36, 0
  %v114 = vsel %vm61, %v37, 0
  %v117 = vsel %vm61, %v38, 0
  %v120 = vsel %vm61, %v39, 0
  %v123 = vsel %vm61, %v40, 0
  %v126 = vsel %vm61, %v41, 0
  %v129 = vsel %vm61, %v42, 0
  %v132 = vsel %vm61, %v43, 0
  %v135 = vsel %vm61, %v44, 0
  %v138 = vsel %vm61, %v45, 0
  %v141 = vsel %vm61, %v46, 0
  %v144 = vsel %vm61, %v47, 0
  %v147 = vsel %vm61, %v48, 0
  %v150 = vsel %vm61, %v49, 0
  %v153 = vsel %vm61, %v50, 0
  %v156 = vsel %vm61, %v51, 0
  %158 = vmatprep.subr.mxu0 0.0
  %159 = vmatpush1.msra.mxu0 %v52
  %160 = vmatprep.subr.mxu0 0.0
  %161 = vmatpush1.msra.mxu0 %v53
  %162 = vmatprep.subr.mxu0 0.0
  %163 = vmatpush1.msra.mxu0 0.0
  %164 = vmatprep.subr.mxu0 0.0
  %165 = vmatpush1.msra.mxu0 0.0
  %166 = vmatprep.subr.mxu0 0.0
  %167 = vmatpush1.msra.mxu0 0.0
  %168 = vmatprep.subr.mxu0 0.0
  %169 = vmatpush1.msra.mxu0 0.0
  %170 = vmatprep.subr.mxu0 0.0
  %171 = vmatpush1.msra.mxu0 0.0
  %172 = vmatprep.subr.mxu0 0.0
  %173 = vmatpush1.msra.mxu0 0.0
  %174 = vmatprep.subr.mxu0 0.0
  %175 = vmatpush1.msra.mxu0 0.0
  %176 = vmatprep.subr.mxu0 0.0
  %177 = vmatpush1.msra.mxu0 0.0
  %178 = vmatprep.subr.mxu0 0.0
  %179 = vmatpush1.msra.mxu0 0.0
  %180 = vmatprep.subr.mxu0 0.0
  %181 = vmatpush1.msra.mxu0 0.0
  %182 = vmatprep.subr.mxu0 0.0
  %183 = vmatpush1.msra.mxu0 0.0
  %184 = vmatprep.subr.mxu0 0.0
  %185 = vmatpush1.msra.mxu0 0.0
  %186 = vmatprep.subr.mxu0 0.0
  %187 = vmatpush1.msra.mxu0 0.0
  %188 = vmatprep.subr.mxu0 0.0
  %189 = vmatpush1.msra.mxu0 0.0
  %190 = vmatprep.subr.mxu0 0.0
  %191 = vmatpush1.msra.mxu0 0.0
  %192 = vmatprep.subr.mxu0 0.0
  %193 = vmatpush1.msra.mxu0 0.0
  %194 = vmatprep.subr.mxu0 0.0
  %195 = vmatpush1.msra.mxu0 0.0
  %196 = vmatprep.subr.mxu0 0.0
  %197 = vmatpush1.msra.mxu0 0.0
  %198 = vmatprep.subr.mxu0 0.0
  %199 = vmatpush1.msra.mxu0 0.0
  %200 = vmatprep.subr.mxu0 0.0
  %201 = vmatpush1.msra.mxu0 0.0
  %202 = vmatprep.subr.mxu0 0.0
  %203 = vmatpush1.msra.mxu0 0.0
  %204 = vmatprep.subr.mxu0 0.0
  %205 = vmatpush1.msra.mxu0 0.0
  %206 = vmatprep.subr.mxu0 0.0
  %207 = vmatpush1.msra.mxu0 0.0
  %208 = vmatprep.subr.mxu0 0.0
  %209 = vmatpush1.msra.mxu0 0.0
  %210 = vmatprep.subr.mxu0 0.0
  %211 = vmatpush1.msra.mxu0 0.0
  %212 = vmatprep.subr.mxu0 0.0
  %213 = vmatpush1.msra.mxu0 0.0
  %214 = vmatprep.subr.mxu0 0.0
  %215 = vmatpush1.msra.mxu0 0.0
  %216 = vmatprep.subr.mxu0 0.0
  %217 = vmatpush1.msra.mxu0 0.0
  %218 = vmatprep.subr.mxu0 0.0
  %219 = vmatpush1.msra.mxu0 0.0
  %220 = vmatprep.subr.mxu0 0.0
  %221 = vmatpush1.msra.mxu0 0.0
  %222 = vmatprep.mubr.f32.mxu0 0.0
  %223 = vmatmul.mubr.f32.gmra.mrb[0].mxu0 %v63
  %v224 = vpop.f32.mrb[0].mxu0
  %v225 = vadd.f32 %v59, %v224
  %v226 = vpop.f32.mrb[0].mxu0
  %227 = vmatprep.mubr.f32.mxu0 0.0
  %228 = vmatmul.mubr.f32.gmra.mrb[0].mxu0 %v66
  %v229 = vpop.f32.mrb[0].mxu0
  %v230 = vadd.f32 %v59, %v229
  %v231 = vpop.f32.mrb[0].mxu0
  %232 = vmatprep.mubr.f32.mxu0 0.0
  %233 = vmatmul.mubr.f32.gmra.mrb[0].mxu0 %v69
  %v234 = vpop.f32.mrb[0].mxu0
  %v235 = vadd.f32 %v59, %v234
  %v236 = vpop.f32.mrb[0].mxu0
  %237 = vmatprep.mubr.f32.mxu0 0.0
  %238 = vmatmul.mubr.f32.gmra.mrb[0].mxu0 %v72
  %v239 = vpop.f32.mrb[0].mxu0
  %v240 = vadd.f32 %v59, %v239
  %v241 = vpop.f32.mrb[0].mxu0
  %242 = vmatprep.mubr.f32.mxu0 0.0
  %243 = vmatmul.mubr.f32.gmra.mrb[0].mxu0 %v75
  %v244 = vpop.f32.mrb[0].mxu0
  %v245 = vadd.f32 %v59, %v244
  %v246 = vpop.f32.mrb[0].mxu0
  %247 = vmatprep.mubr.f32.mxu0 0.0
  %248 = vmatmul.mubr.f32.gmra.mrb[0].mxu0 %v78
  %v249 = vpop.f32.mrb[0].mxu0
  %v250 = vadd.f32 %v59, %v249
  %v251 = vpop.f32.mrb[0].mxu0
  %252 = vmatprep.mubr.f32.mxu0 0.0
  %253 = vmatmul.mubr.f32.gmra.mrb[0].mxu0 %v81
  %v254 = vpop.f32.mrb[0].mxu0
  %v255 = vadd.f32 %v59, %v254
  %v256 = vpop.f32.mrb[0].mxu0
  %257 = vmatprep.mubr.f32.mxu0 0.0
  %258 = vmatmul.mubr.f32.gmra.mrb[0].mxu0 %v84
  %v259 = vpop.f32.mrb[0].mxu0
  %v260 = vadd.f32 %v59, %v259
  %v261 = vpop.f32.mrb[0].mxu0
  %262 = vmatprep.mubr.f32.mxu0 0.0
  %263 = vmatmul.mubr.f32.gmra.mrb[0].mxu0 %v87
  %v264 = vpop.f32.mrb[0].mxu0
  %v265 = vadd.f32 %v59, %v264
  %v266 = vpop.f32.mrb[0].mxu0
  %267 = vmatprep.mubr.f32.mxu0 0.0
  %268 = vmatmul.mubr.f32.gmra.mrb[0].mxu0 %v90
  %v269 = vpop.f32.mrb[0].mxu0
  %v270 = vadd.f32 %v59, %v269
  %v271 = vpop.f32.mrb[0].mxu0
  %272 = vmatprep.mubr.f32.mxu0 0.0
  %273 = vmatmul.mubr.f32.gmra.mrb[0].mxu0 %v93
  %v274 = vpop.f32.mrb[0].mxu0
  %v275 = vadd.f32 %v59, %v274
  %v276 = vpop.f32.mrb[0].mxu0
  %277 = vmatprep.mubr.f32.mxu0 0.0
  %278 = vmatmul.mubr.f32.gmra.mrb[0].mxu0 %v96
  %v279 = vpop.f32.mrb[0].mxu0
  %v280 = vadd.f32 %v59, %v279
  %v281 = vpop.f32.mrb[0].mxu0
  %282 = vmatprep.mubr.f32.mxu0 0.0
  %283 = vmatmul.mubr.f32.gmra.mrb[0].mxu0 %v99
  %v284 = vpop.f32.mrb[0].mxu0
  %v285 = vadd.f32 %v59, %v284
  %v286 = vpop.f32.mrb[0].mxu0
  %287 = vmatprep.mubr.f32.mxu0 0.0
  %288 = vmatmul.mubr.f32.gmra.mrb[0].mxu0 %v102
  %v289 = vpop.f32.mrb[0].mxu0
  %v290 = vadd.f32 %v59, %v289
  %v291 = vpop.f32.mrb[0].mxu0
  %292 = vmatprep.mubr.f32.mxu0 0.0
  %293 = vmatmul.mubr.f32.gmra.mrb[0].mxu0 %v105
  %v294 = vpop.f32.mrb[0].mxu0
  %v295 = vadd.f32 %v59, %v294
  %v296 = vpop.f32.mrb[0].mxu0
  %297 = vmatprep.mubr.f32.mxu0 0.0
  %298 = vmatmul.mubr.f32.gmra.mrb[0].mxu0 %v108
  %v299 = vpop.f32.mrb[0].mxu0
  %v300 = vadd.f32 %v59, %v299
  %v301 = vpop.f32.mrb[0].mxu0
  %302 = vmatprep.mubr.f32.mxu0 0.0
  %303 = vmatmul.mubr.f32.gmra.mrb[0].mxu0 %v111
  %v304 = vpop.f32.mrb[0].mxu0
  %v305 = vadd.f32 %v59, %v304
  %v306 = vpop.f32.mrb[0].mxu0
  %307 = vmatprep.mubr.f32.mxu0 0.0
  %308 = vmatmul.mubr.f32.gmra.mrb[0].mxu0 %v114
  %v309 = vpop.f32.mrb[0].mxu0
  %v310 = vadd.f32 %v59, %v309
  %v311 = vpop.f32.mrb[0].mxu0
  %312 = vmatprep.mubr.f32.mxu0 0.0
  %313 = vmatmul.mubr.f32.gmra.mrb[0].mxu0 %v117
  %v314 = vpop.f32.mrb[0].mxu0
  %v315 = vadd.f32 %v59, %v314
  %v316 = vpop.f32.mrb[0].mxu0
  %317 = vmatprep.mubr.f32.mxu0 0.0
  %318 = vmatmul.mubr.f32.gmra.mrb[0].mxu0 %v120
  %v319 = vpop.f32.mrb[0].mxu0
  %v320 = vadd.f32 %v59, %v319
  %v321 = vpop.f32.mrb[0].mxu0
  %322 = vmatprep.mubr.f32.mxu0 0.0
  %323 = vmatmul.mubr.f32.gmra.mrb[0].mxu0 %v123
  %v324 = vpop.f32.mrb[0].mxu0
  %v325 = vadd.f32 %v59, %v324
  %v326 = vpop.f32.mrb[0].mxu0
  %327 = vmatprep.mubr.f32.mxu0 0.0
  %328 = vmatmul.mubr.f32.gmra.mrb[0].mxu0 %v126
  %v329 = vpop.f32.mrb[0].mxu0
  %v330 = vadd.f32 %v59, %v329
  %v331 = vpop.f32.mrb[0].mxu0
  %332 = vmatprep.mubr.f32.mxu0 0.0
  %333 = vmatmul.mubr.f32.gmra.mrb[0].mxu0 %v129
  %v334 = vpop.f32.mrb[0].mxu0
  %v335 = vadd.f32 %v59, %v334
  %v336 = vpop.f32.mrb[0].mxu0
  %337 = vmatprep.mubr.f32.mxu0 0.0
  %338 = vmatmul.mubr.f32.gmra.mrb[0].mxu0 %v132
  %v339 = vpop.f32.mrb[0].mxu0
  %v340 = vadd.f32 %v59, %v339
  %v341 = vpop.f32.mrb[0].mxu0
  %342 = vmatprep.mubr.f32.mxu0 0.0
  %343 = vmatmul.mubr.f32.gmra.mrb[0].mxu0 %v135
  %v344 = vpop.f32.mrb[0].mxu0
  %v345 = vadd.f32 %v59, %v344
  %v346 = vpop.f32.mrb[0].mxu0
  %347 = vmatprep.mubr.f32.mxu0 0.0
  %348 = vmatmul.mubr.f32.gmra.mrb[0].mxu0 %v138
  %v349 = vpop.f32.mrb[0].mxu0
  %v350 = vadd.f32 %v59, %v349
  %v351 = vpop.f32.mrb[0].mxu0
  %352 = vmatprep.mubr.f32.mxu0 0.0
  %353 = vmatmul.mubr.f32.gmra.mrb[0].mxu0 %v141
  %v354 = vpop.f32.mrb[0].mxu0
  %v355 = vadd.f32 %v59, %v354
  %v356 = vpop.f32.mrb[0].mxu0
  %357 = vmatprep.mubr.f32.mxu0 0.0
  %358 = vmatmul.mubr.f32.gmra.mrb[0].mxu0 %v144
  %v359 = vpop.f32.mrb[0].mxu0
  %v360 = vadd.f32 %v59, %v359
  %v361 = vpop.f32.mrb[0].mxu0
  %362 = vmatprep.mubr.f32.mxu0 0.0
  %363 = vmatmul.mubr.f32.gmra.mrb[0].mxu0 %v147
  %v364 = vpop.f32.mrb[0].mxu0
  %v365 = vadd.f32 %v59, %v364
  %v366 = vpop.f32.mrb[0].mxu0
  %367 = vmatprep.mubr.f32.mxu0 0.0
  %368 = vmatmul.mubr.f32.gmra.mrb[0].mxu0 %v150
  %v369 = vpop.f32.mrb[0].mxu0
  %v370 = vadd.f32 %v59, %v369
  %v371 = vpop.f32.mrb[0].mxu0
  %372 = vmatprep.mubr.f32.mxu0 0.0
  %373 = vmatmul.mubr.f32.gmra.mrb[0].mxu0 %v153
  %v374 = vpop.f32.mrb[0].mxu0
  %v375 = vadd.f32 %v59, %v374
  %v376 = vpop.f32.mrb[0].mxu0
  %377 = vmatprep.mubr.f32.mxu0 0.0
  %378 = vmatmul.mubr.f32.gmra.mrb[0].mxu0 %v156
  %v379 = vpop.f32.mrb[0].mxu0
  %v380 = vadd.f32 %v59, %v379
  %v381 = vpop.f32.mrb[0].mxu0
  %382 = vdwg.mxu0
  %v383 = vmax.f32 %v225, 0.0
  %v384 = vmax.f32 %v230, 0.0
  %v385 = vmax.f32 %v235, 0.0
  %v386 = vmax.f32 %v240, 0.0
  %v387 = vmax.f32 %v245, 0.0
  %v388 = vmax.f32 %v250, 0.0
  %v389 = vmax.f32 %v255, 0.0
  %v390 = vmax.f32 %v260, 0.0
  %v391 = vmax.f32 %v265, 0.0
  %v392 = vmax.f32 %v270, 0.0
  %v393 = vmax.f32 %v275, 0.0
  %v394 = vmax.f32 %v280, 0.0
  %v395 = vmax.f32 %v285, 0.0
  %v396 = vmax.f32 %v290, 0.0
  %v397 = vmax.f32 %v295, 0.0
  %v398 = vmax.f32 %v300, 0.0
  %v399 = vmax.f32 %v305, 0.0
  %v400 = vmax.f32 %v310, 0.0
  %v401 = vmax.f32 %v315, 0.0
  %v402 = vmax.f32 %v320, 0.0
  %v403 = vmax.f32 %v325, 0.0
  %v404 = vmax.f32 %v330, 0.0
  %v405 = vmax.f32 %v335, 0.0
  %v406 = vmax.f32 %v340, 0.0
  %v407 = vmax.f32 %v345, 0.0
  %v408 = vmax.f32 %v350, 0.0
  %v409 = vmax.f32 %v355, 0.0
  %v410 = vmax.f32 %v360, 0.0
  %v411 = vmax.f32 %v365, 0.0
  %v412 = vmax.f32 %v370, 0.0
  %v413 = vmax.f32 %v375, 0.0
  %v414 = vmax.f32 %v380, 0.0
  %v415 = vld [vmem:[%s3] sm:$0xff]
  %v416 = vld [vmem:[%s3 + $0x8] sm:$0xff]
  %v417 = vld [vmem:[%s3 + $0x10] sm:$0xff]
  %v418 = vld [vmem:[%s3 + $0x18] sm:$0xff]
  %v419 = vld [vmem:[%s4] sm:$0x1]
  %v421 = vlaneseq
  %v422 = vshrl.u32 %v421, 7
  %v423 = vsub.s32 0, %v422
  %v424 = vrot.slane %v419, %v423
  %vm426 = vcmask 261120
  %v428 = vsel %vm426, %v383, 0
  %v431 = vsel %vm426, %v384, 0
  %v434 = vsel %vm426, %v385, 0
  %v437 = vsel %vm426, %v386, 0
  %v440 = vsel %vm426, %v387, 0
  %v443 = vsel %vm426, %v388, 0
  %v446 = vsel %vm426, %v389, 0
  %v449 = vsel %vm426, %v390, 0
  %v452 = vsel %vm426, %v391, 0
  %v455 = vsel %vm426, %v392, 0
  %v458 = vsel %vm426, %v393, 0
  %v461 = vsel %vm426, %v394, 0
  %v464 = vsel %vm426, %v395, 0
  %v467 = vsel %vm426, %v396, 0
  %v470 = vsel %vm426, %v397, 0
  %v473 = vsel %vm426, %v398, 0
  %v476 = vsel %vm426, %v399, 0
  %v479 = vsel %vm426, %v400, 0
  %v482 = vsel %vm426, %v401, 0
  %v485 = vsel %vm426, %v402, 0
  %v488 = vsel %vm426, %v403, 0
  %v491 = vsel %vm426, %v404, 0
  %v494 = vsel %vm426, %v405, 0
  %v497 = vsel %vm426, %v406, 0
  %v500 = vsel %vm426, %v407, 0
  %v503 = vsel %vm426, %v408, 0
  %v506 = vsel %vm426, %v409, 0
  %v509 = vsel %vm426, %v410, 0
  %v512 = vsel %vm426, %v411, 0
  %v515 = vsel %vm426, %v412, 0
  %v518 = vsel %vm426, %v413, 0
  %v521 = vsel %vm426, %v414, 0
  %523 = vmatprep.subr.mxu0 0.0
  %524 = vmatpush1.msra.mxu0 %v415
  %525 = vmatprep.subr.mxu0 0.0
  %526 = vmatpush1.msra.mxu0 %v416
  %527 = vmatprep.subr.mxu0 0.0
  %528 = vmatpush1.msra.mxu0 %v417
  %529 = vmatprep.subr.mxu0 0.0
  %530 = vmatpush1.msra.mxu0 %v418
  %531 = vmatprep.subr.mxu0 0.0
  %532 = vmatpush1.msra.mxu0 0.0
  %533 = vmatprep.subr.mxu0 0.0
  %534 = vmatpush1.msra.mxu0 0.0
  %535 = vmatprep.subr.mxu0 0.0
  %536 = vmatpush1.msra.mxu0 0.0
  %537 = vmatprep.subr.mxu0 0.0
  %538 = vmatpush1.msra.mxu0 0.0
  %539 = vmatprep.subr.mxu0 0.0
  %540 = vmatpush1.msra.mxu0 0.0
  %541 = vmatprep.subr.mxu0 0.0
  %542 = vmatpush1.msra.mxu0 0.0
  %543 = vmatprep.subr.mxu0 0.0
  %544 = vmatpush1.msra.mxu0 0.0
  %545 = vmatprep.subr.mxu0 0.0
  %546 = vmatpush1.msra.mxu0 0.0
  %547 = vmatprep.subr.mxu0 0.0
  %548 = vmatpush1.msra.mxu0 0.0
  %549 = vmatprep.subr.mxu0 0.0
  %550 = vmatpush1.msra.mxu0 0.0
  %551 = vmatprep.subr.mxu0 0.0
  %552 = vmatpush1.msra.mxu0 0.0
  %553 = vmatprep.subr.mxu0 0.0
  %554 = vmatpush1.msra.mxu0 0.0
  %555 = vmatprep.subr.mxu0 0.0
  %556 = vmatpush1.msra.mxu0 0.0
  %557 = vmatprep.subr.mxu0 0.0
  %558 = vmatpush1.msra.mxu0 0.0
  %559 = vmatprep.subr.mxu0 0.0
  %560 = vmatpush1.msra.mxu0 0.0
  %561 = vmatprep.subr.mxu0 0.0
  %562 = vmatpush1.msra.mxu0 0.0
  %563 = vmatprep.subr.mxu0 0.0
  %564 = vmatpush1.msra.mxu0 0.0
  %565 = vmatprep.subr.mxu0 0.0
  %566 = vmatpush1.msra.mxu0 0.0
  %567 = vmatprep.subr.mxu0 0.0
  %568 = vmatpush1.msra.mxu0 0.0
  %569 = vmatprep.subr.mxu0 0.0
  %570 = vmatpush1.msra.mxu0 0.0
  %571 = vmatprep.subr.mxu0 0.0
  %572 = vmatpush1.msra.mxu0 0.0
  %573 = vmatprep.subr.mxu0 0.0
  %574 = vmatpush1.msra.mxu0 0.0
  %575 = vmatprep.subr.mxu0 0.0
  %576 = vmatpush1.msra.mxu0 0.0
  %577 = vmatprep.subr.mxu0 0.0
  %578 = vmatpush1.msra.mxu0 0.0
  %579 = vmatprep.subr.mxu0 0.0
  %580 = vmatpush1.msra.mxu0 0.0
  %581 = vmatprep.subr.mxu0 0.0
  %582 = vmatpush1.msra.mxu0 0.0
  %583 = vmatprep.subr.mxu0 0.0
  %584 = vmatpush1.msra.mxu0 0.0
  %585 = vmatprep.subr.mxu0 0.0
  %586 = vmatpush1.msra.mxu0 0.0
  %587 = vmatprep.mubr.f32.mxu0 0.0
  %588 = vmatmul.mubr.f32.gmra.mrb[0].mxu0 %v428
  %v589 = vpop.f32.mrb[0].mxu0
  %v590 = vadd.f32 %v424, %v589
  %v591 = vpop.f32.mrb[0].mxu0
  %592 = vmatprep.mubr.f32.mxu0 0.0
  %593 = vmatmul.mubr.f32.gmra.mrb[0].mxu0 %v431
  %v594 = vpop.f32.mrb[0].mxu0
  %v595 = vadd.f32 %v424, %v594
  %v596 = vpop.f32.mrb[0].mxu0
  %597 = vmatprep.mubr.f32.mxu0 0.0
  %598 = vmatmul.mubr.f32.gmra.mrb[0].mxu0 %v434
  %v599 = vpop.f32.mrb[0].mxu0
  %v600 = vadd.f32 %v424, %v599
  %v601 = vpop.f32.mrb[0].mxu0
  %602 = vmatprep.mubr.f32.mxu0 0.0
  %603 = vmatmul.mubr.f32.gmra.mrb[0].mxu0 %v437
  %v604 = vpop.f32.mrb[0].mxu0
  %v605 = vadd.f32 %v424, %v604
  %v606 = vpop.f32.mrb[0].mxu0
  %607 = vmatprep.mubr.f32.mxu0 0.0
  %608 = vmatmul.mubr.f32.gmra.mrb[0].mxu0 %v440
  %v609 = vpop.f32.mrb[0].mxu0
  %v610 = vadd.f32 %v424, %v609
  %v611 = vpop.f32.mrb[0].mxu0
  %612 = vmatprep.mubr.f32.mxu0 0.0
  %613 = vmatmul.mubr.f32.gmra.mrb[0].mxu0 %v443
  %v614 = vpop.f32.mrb[0].mxu0
  %v615 = vadd.f32 %v424, %v614
  %v616 = vpop.f32.mrb[0].mxu0
  %617 = vmatprep.mubr.f32.mxu0 0.0
  %618 = vmatmul.mubr.f32.gmra.mrb[0].mxu0 %v446
  %v619 = vpop.f32.mrb[0].mxu0
  %v620 = vadd.f32 %v424, %v619
  %v621 = vpop.f32.mrb[0].mxu0
  %622 = vmatprep.mubr.f32.mxu0 0.0
  %623 = vmatmul.mubr.f32.gmra.mrb[0].mxu0 %v449
  %v624 = vpop.f32.mrb[0].mxu0
  %v625 = vadd.f32 %v424, %v624
  %v626 = vpop.f32.mrb[0].mxu0
  %627 = vmatprep.mubr.f32.mxu0 0.0
  %628 = vmatmul.mubr.f32.gmra.mrb[0].mxu0 %v452
  %v629 = vpop.f32.mrb[0].mxu0
  %v630 = vadd.f32 %v424, %v629
  %v631 = vpop.f32.mrb[0].mxu0
  %632 = vmatprep.mubr.f32.mxu0 0.0
  %633 = vmatmul.mubr.f32.gmra.mrb[0].mxu0 %v455
  %v634 = vpop.f32.mrb[0].mxu0
  %v635 = vadd.f32 %v424, %v634
  %v636 = vpop.f32.mrb[0].mxu0
  %637 = vmatprep.mubr.f32.mxu0 0.0
  %638 = vmatmul.mubr.f32.gmra.mrb[0].mxu0 %v458
  %v639 = vpop.f32.mrb[0].mxu0
  %v640 = vadd.f32 %v424, %v639
  %v641 = vpop.f32.mrb[0].mxu0
  %642 = vmatprep.mubr.f32.mxu0 0.0
  %643 = vmatmul.mubr.f32.gmra.mrb[0].mxu0 %v461
  %v644 = vpop.f32.mrb[0].mxu0
  %v645 = vadd.f32 %v424, %v644
  %v646 = vpop.f32.mrb[0].mxu0
  %647 = vmatprep.mubr.f32.mxu0 0.0
  %648 = vmatmul.mubr.f32.gmra.mrb[0].mxu0 %v464
  %v649 = vpop.f32.mrb[0].mxu0
  %v650 = vadd.f32 %v424, %v649
  %v651 = vpop.f32.mrb[0].mxu0
  %652 = vmatprep.mubr.f32.mxu0 0.0
  %653 = vmatmul.mubr.f32.gmra.mrb[0].mxu0 %v467
  %v654 = vpop.f32.mrb[0].mxu0
  %v655 = vadd.f32 %v424, %v654
  %v656 = vpop.f32.mrb[0].mxu0
  %657 = vmatprep.mubr.f32.mxu0 0.0
  %658 = vmatmul.mubr.f32.gmra.mrb[0].mxu0 %v470
  %v659 = vpop.f32.mrb[0].mxu0
  %v660 = vadd.f32 %v424, %v659
  %v661 = vpop.f32.mrb[0].mxu0
  %662 = vmatprep.mubr.f32.mxu0 0.0
  %663 = vmatmul.mubr.f32.gmra.mrb[0].mxu0 %v473
  %v664 = vpop.f32.mrb[0].mxu0
  %v665 = vadd.f32 %v424, %v664
  %v666 = vpop.f32.mrb[0].mxu0
  %667 = vmatprep.mubr.f32.mxu0 0.0
  %668 = vmatmul.mubr.f32.gmra.mrb[0].mxu0 %v476
  %v669 = vpop.f32.mrb[0].mxu0
  %v670 = vadd.f32 %v424, %v669
  %v671 = vpop.f32.mrb[0].mxu0
  %672 = vmatprep.mubr.f32.mxu0 0.0
  %673 = vmatmul.mubr.f32.gmra.mrb[0].mxu0 %v479
  %v674 = vpop.f32.mrb[0].mxu0
  %v675 = vadd.f32 %v424, %v674
  %v676 = vpop.f32.mrb[0].mxu0
  %677 = vmatprep.mubr.f32.mxu0 0.0
  %678 = vmatmul.mubr.f32.gmra.mrb[0].mxu0 %v482
  %v679 = vpop.f32.mrb[0].mxu0
  %v680 = vadd.f32 %v424, %v679
  %v681 = vpop.f32.mrb[0].mxu0
  %682 = vmatprep.mubr.f32.mxu0 0.0
  %683 = vmatmul.mubr.f32.gmra.mrb[0].mxu0 %v485
  %v684 = vpop.f32.mrb[0].mxu0
  %v685 = vadd.f32 %v424, %v684
  %v686 = vpop.f32.mrb[0].mxu0
  %687 = vmatprep.mubr.f32.mxu0 0.0
  %688 = vmatmul.mubr.f32.gmra.mrb[0].mxu0 %v488
  %v689 = vpop.f32.mrb[0].mxu0
  %v690 = vadd.f32 %v424, %v689
  %v691 = vpop.f32.mrb[0].mxu0
  %692 = vmatprep.mubr.f32.mxu0 0.0
  %693 = vmatmul.mubr.f32.gmra.mrb[0].mxu0 %v491
  %v694 = vpop.f32.mrb[0].mxu0
  %v695 = vadd.f32 %v424, %v694
  %v696 = vpop.f32.mrb[0].mxu0
  %697 = vmatprep.mubr.f32.mxu0 0.0
  %698 = vmatmul.mubr.f32.gmra.mrb[0].mxu0 %v494
  %v699 = vpop.f32.mrb[0].mxu0
  %v700 = vadd.f32 %v424, %v699
  %v701 = vpop.f32.mrb[0].mxu0
  %702 = vmatprep.mubr.f32.mxu0 0.0
  %703 = vmatmul.mubr.f32.gmra.mrb[0].mxu0 %v497
  %v704 = vpop.f32.mrb[0].mxu0
  %v705 = vadd.f32 %v424, %v704
  %v706 = vpop.f32.mrb[0].mxu0
  %707 = vmatprep.mubr.f32.mxu0 0.0
  %708 = vmatmul.mubr.f32.gmra.mrb[0].mxu0 %v500
  %v709 = vpop.f32.mrb[0].mxu0
  %v710 = vadd.f32 %v424, %v709
  %v711 = vpop.f32.mrb[0].mxu0
  %712 = vmatprep.mubr.f32.mxu0 0.0
  %713 = vmatmul.mubr.f32.gmra.mrb[0].mxu0 %v503
  %v714 = vpop.f32.mrb[0].mxu0
  %v715 = vadd.f32 %v424, %v714
  %v716 = vpop.f32.mrb[0].mxu0
  %717 = vmatprep.mubr.f32.mxu0 0.0
  %718 = vmatmul.mubr.f32.gmra.mrb[0].mxu0 %v506
  %v719 = vpop.f32.mrb[0].mxu0
  %v720 = vadd.f32 %v424, %v719
  %v721 = vpop.f32.mrb[0].mxu0
  %722 = vmatprep.mubr.f32.mxu0 0.0
  %723 = vmatmul.mubr.f32.gmra.mrb[0].mxu0 %v509
  %v724 = vpop.f32.mrb[0].mxu0
  %v725 = vadd.f32 %v424, %v724
  %v726 = vpop.f32.mrb[0].mxu0
  %727 = vmatprep.mubr.f32.mxu0 0.0
  %728 = vmatmul.mubr.f32.gmra.mrb[0].mxu0 %v512
  %v729 = vpop.f32.mrb[0].mxu0
  %v730 = vadd.f32 %v424, %v729
  %v731 = vpop.f32.mrb[0].mxu0
  %732 = vmatprep.mubr.f32.mxu0 0.0
  %733 = vmatmul.mubr.f32.gmra.mrb[0].mxu0 %v515
  %v734 = vpop.f32.mrb[0].mxu0
  %v735 = vadd.f32 %v424, %v734
  %v736 = vpop.f32.mrb[0].mxu0
  %737 = vmatprep.mubr.f32.mxu0 0.0
  %738 = vmatmul.mubr.f32.gmra.mrb[0].mxu0 %v518
  %v739 = vpop.f32.mrb[0].mxu0
  %v740 = vadd.f32 %v424, %v739
  %v741 = vpop.f32.mrb[0].mxu0
  %742 = vmatprep.mubr.f32.mxu0 0.0
  %743 = vmatmul.mubr.f32.gmra.mrb[0].mxu0 %v521
  %v744 = vpop.f32.mrb[0].mxu0
  %v745 = vadd.f32 %v424, %v744
  %v746 = vpop.f32.mrb[0].mxu0
  %747 = vdwg.mxu0
  %vm748 = vcmask 31744
  %749 = vst.msk [vmem:[%s5] sm:$0xff] %vm748, %v590
  %750 = vst.msk [vmem:[%s5 + $0x8] sm:$0xff] %vm748, %v595
  %751 = vst.msk [vmem:[%s5 + $0x10] sm:$0xff] %vm748, %v600
  %752 = vst.msk [vmem:[%s5 + $0x18] sm:$0xff] %vm748, %v605
  %753 = vst.msk [vmem:[%s5 + $0x20] sm:$0xff] %vm748, %v610
  %754 = vst.msk [vmem:[%s5 + $0x28] sm:$0xff] %vm748, %v615
  %755 = vst.msk [vmem:[%s5 + $0x30] sm:$0xff] %vm748, %v620
  %756 = vst.msk [vmem:[%s5 + $0x38] sm:$0xff] %vm748, %v625
  %757 = vst.msk [vmem:[%s5 + $0x40] sm:$0xff] %vm748, %v630
  %758 = vst.msk [vmem:[%s5 + $0x48] sm:$0xff] %vm748, %v635
  %759 = vst.msk [vmem:[%s5 + $0x50] sm:$0xff] %vm748, %v640
  %760 = vst.msk [vmem:[%s5 + $0x58] sm:$0xff] %vm748, %v645
  %761 = vst.msk [vmem:[%s5 + $0x60] sm:$0xff] %vm748, %v650
  %762 = vst.msk [vmem:[%s5 + $0x68] sm:$0xff] %vm748, %v655
  %763 = vst.msk [vmem:[%s5 + $0x70] sm:$0xff] %vm748, %v660
  %764 = vst.msk [vmem:[%s5 + $0x78] sm:$0xff] %vm748, %v665
  %765 = vst.msk [vmem:[%s5 + $0x80] sm:$0xff] %vm748, %v670
  %766 = vst.msk [vmem:[%s5 + $0x88] sm:$0xff] %vm748, %v675
  %767 = vst.msk [vmem:[%s5 + $0x90] sm:$0xff] %vm748, %v680
  %768 = vst.msk [vmem:[%s5 + $0x98] sm:$0xff] %vm748, %v685
  %769 = vst.msk [vmem:[%s5 + $0xa0] sm:$0xff] %vm748, %v690
  %770 = vst.msk [vmem:[%s5 + $0xa8] sm:$0xff] %vm748, %v695
  %771 = vst.msk [vmem:[%s5 + $0xb0] sm:$0xff] %vm748, %v700
  %772 = vst.msk [vmem:[%s5 + $0xb8] sm:$0xff] %vm748, %v705
  %773 = vst.msk [vmem:[%s5 + $0xc0] sm:$0xff] %vm748, %v710
  %774 = vst.msk [vmem:[%s5 + $0xc8] sm:$0xff] %vm748, %v715
  %775 = vst.msk [vmem:[%s5 + $0xd0] sm:$0xff] %vm748, %v720
  %776 = vst.msk [vmem:[%s5 + $0xd8] sm:$0xff] %vm748, %v725
  %777 = vst.msk [vmem:[%s5 + $0xe0] sm:$0xff] %vm748, %v730
  %778 = vst.msk [vmem:[%s5 + $0xe8] sm:$0xff] %vm748, %v735
  %779 = vst.msk [vmem:[%s5 + $0xf0] sm:$0xff] %vm748, %v740
  %780 = vst.msk [vmem:[%s5 + $0xf8] sm:$0xff] %vm748, %v745
  // Predicated region
  $region22: #{tpu_custom_call.1} parent=0 // pred_check
    _
  $region23: #{tpu_custom_call.1} parent=0 // pred_check_branch
    %782 = sbr.rel (0) target = $region25
  $region24: #{tpu_custom_call.1} parent=0 // pred_region
    _
  $region25: #{tpu_custom_call.1} parent=0 // pred_fallthru
    _
  // Predicated region
  $region26: #{tpu_custom_call.1} parent=0 // pred_check
    _
  $region27: #{tpu_custom_call.1} parent=0 // pred_check_branch
    %784 = sbr.rel (0) target = $region29
  $region28: #{tpu_custom_call.1} parent=0 // pred_region
    _
  $region29: #{tpu_custom_call.1} parent=0 // pred_fallthru
    _

</llo_original>
